<compile_context>
chip_gen: v7x
topology: tpu7x:2x2x1
jax: 0.10.0
libtpu: 0.0.40
codegen_flags: <defaults>
</compile_context>

<pallas_src>
import functools

import jax
import jax.numpy as jnp
from jax.experimental import pallas as pl
from jax.experimental.pallas import tpu as pltpu

LOG_SIG_MAX = 2.0
LOG_SIG_MIN = -20.0


def gaussian_policy_kernel(
    state_ref,            # (TB, S)      f32
    w1_ref, b1_ref,       # (S, H) cd,  (1, H)  f32
    w2_ref, b2_ref,       # (H, H) cd,  (1, H)  f32
    wh_ref, bh_ref,       # (H, OW) cd, (1, OW) f32   -- fused, lane-padded heads
    out_ref,              # (TB, OW)    f32           -- [tanh(mu) | clip(logstd) | 0-pad]
    *, action_dim, compute_dtype,
):
    # Weights arrive already in compute_dtype (pre-cast once in prepare_params);
    # only the activations are cast per step.  Accumulation stays f32.
    x = state_ref[...].astype(compute_dtype)

    # input_layer + ReLU
    h1 = jnp.dot(x, w1_ref[...], preferred_element_type=jnp.float32) + b1_ref[...]
    h1 = jnp.maximum(h1, 0.0)

    # hidden_layer + ReLU
    h2 = jnp.dot(h1.astype(compute_dtype), w2_ref[...],
                 preferred_element_type=jnp.float32) + b2_ref[...]
    h2 = jnp.maximum(h2, 0.0)

    # fused heads: one matmul producing [mu | logstd | padding]
    y = jnp.dot(h2.astype(compute_dtype), wh_ref[...],
                preferred_element_type=jnp.float32) + bh_ref[...]

    # Column-wise epilogue selected by a lane iota, then one lane-dense store.
    # Padded lanes (col >= 2A) have zero weights/bias -> clip(0) = 0, never read.
    col = jax.lax.broadcasted_iota(jnp.int32, y.shape, 1)
    out_ref[...] = jnp.where(
        col < action_dim,
        jnp.tanh(y),
        jnp.clip(y, LOG_SIG_MIN, LOG_SIG_MAX),
    ).astype(out_ref.dtype)


def prepare_params(params, *, compute_dtype=jnp.float32, lane_width=128):
    """One-time preprocessing (hoisted out of the forward path):
      * fuse the mu / logstd heads into one (H, OW) weight, OW = 128-lane-padded 2A,
      * pre-cast matmul weights to compute_dtype (f32 or bf16),
      * keep biases in f32 (added after the f32-accumulating matmul).
    """
    H = params["w1"].shape[1]
    A = params["wmu"].shape[1]
    out_w = ((2 * A + lane_width - 1) // lane_width) * lane_width
    out_w = max(out_w, lane_width)

    w_heads = jnp.zeros((H, out_w), jnp.float32)
    w_heads = w_heads.at[:, :A].set(params["wmu"]).at[:, A:2 * A].set(params["wls"])
    b_heads = jnp.zeros((1, out_w), jnp.float32)
    b_heads = b_heads.at[:, :A].set(params["bmu"]).at[:, A:2 * A].set(params["bls"])

    return dict(
        w1=params["w1"].astype(compute_dtype),
        b1=params["b1"].astype(jnp.float32),
        w2=params["w2"].astype(compute_dtype),
        b2=params["b2"].astype(jnp.float32),
        wh=w_heads.astype(compute_dtype),
        bh=b_heads.astype(jnp.float32),
    )


def gaussian_policy_forward(state, prepped, action_dim, *, block_b=1024,
                            vmem_limit_bytes=None):
    """Fused GaussianPolicy.forward. Returns (mu, logstd), each (B, action_dim) f32.

    `prepped` comes from prepare_params().  block_b: batch tile (large to
    amortize per-step overhead; automatically reduced to keep >= 2 grid steps
    for v7x megacore when B allows).
    """
    B, S = state.shape
    H = prepped["w1"].shape[1]
    out_w = prepped["wh"].shape[1]
    compute_dtype = prepped["w1"].dtype

    # ---- batch tile selection -------------------------------------------------
    tb = max(8, (min(block_b, B) // 8) * 8)
    if B >= 16 and pl.cdiv(B, tb) < 2:
        # keep at least 2 grid steps so the "parallel" axis can use both v7x TCs
        tb = max(8, ((pl.cdiv(B, 2) + 7) // 8) * 8)
    b_pad = pl.cdiv(B, tb) * tb
    if b_pad != B:
        state = jnp.pad(state, ((0, b_pad - B), (0, 0)))
    grid = (b_pad // tb,)

    def weight_spec(arr):
        # Constant index_map: weights/biases stay VMEM-resident across steps.
        return pl.BlockSpec(arr.shape, lambda i: (0,) * arr.ndim)

    itemsize = jnp.dtype(compute_dtype).itemsize
    flops = 2 * b_pad * (S * H + H * H + H * out_w)
    transcendentals = b_pad * out_w
    bytes_accessed = (4 * (b_pad * S + b_pad * out_w + 2 * H + out_w)
                      + itemsize * (S * H + H * H + H * out_w))

    cp_kwargs = dict(dimension_semantics=("parallel",))  # megacore on v7x
    if vmem_limit_bytes is not None:
        cp_kwargs["vmem_limit_bytes"] = vmem_limit_bytes

    fused = pl.pallas_call(
        functools.partial(gaussian_policy_kernel,
                          action_dim=action_dim, compute_dtype=compute_dtype),
        out_shape=jax.ShapeDtypeStruct((b_pad, out_w), jnp.float32),
        grid=grid,
        in_specs=[
            pl.BlockSpec((tb, S), lambda i: (i, 0)),       # state: tiled over batch
            weight_spec(prepped["w1"]), weight_spec(prepped["b1"]),
            weight_spec(prepped["w2"]), weight_spec(prepped["b2"]),
            weight_spec(prepped["wh"]), weight_spec(prepped["bh"]),
        ],
        out_specs=pl.BlockSpec((tb, out_w), lambda i: (i, 0)),
        compiler_params=pltpu.CompilerParams(**cp_kwargs),
        cost_estimate=pl.CostEstimate(flops=flops,
                                      transcendentals=transcendentals,
                                      bytes_accessed=bytes_accessed),
    )(state, prepped["w1"], prepped["b1"], prepped["w2"], prepped["b2"],
      prepped["wh"], prepped["bh"])

    mu = fused[:B, :action_dim]
    logstd = fused[:B, action_dim:2 * action_dim]
    return mu, logstd


def init_params(key, state_dim, action_dim, hidden_dim):
    """Deterministic init mimicking PyTorch nn.Linear (uniform +- 1/sqrt(fan_in))."""
    ks = jax.random.split(key, 8)

    def linear(kw, kb, fan_in, fan_out):
        bound = 1.0 / jnp.sqrt(jnp.float32(fan_in))
        w = jax.random.uniform(kw, (fan_in, fan_out), jnp.float32, -bound, bound)
        b = jax.random.uniform(kb, (1, fan_out), jnp.float32, -bound, bound)
        return w, b

    w1, b1 = linear(ks[0], ks[1], state_dim, hidden_dim)
    w2, b2 = linear(ks[2], ks[3], hidden_dim, hidden_dim)
    wmu, bmu = linear(ks[4], ks[5], hidden_dim, action_dim)
    wls, bls = linear(ks[6], ks[7], hidden_dim, action_dim)
    return dict(w1=w1, b1=b1, w2=w2, b2=b2, wmu=wmu, bmu=bmu, wls=wls, bls=bls)


def reference_forward(state, p):
    hp = jax.lax.Precision.HIGHEST
    x = jnp.maximum(jnp.dot(state, p["w1"], precision=hp) + p["b1"], 0.0)
    x = jnp.maximum(jnp.dot(x, p["w2"], precision=hp) + p["b2"], 0.0)
    mu = jnp.tanh(jnp.dot(x, p["wmu"], precision=hp) + p["bmu"])
    logstd = jnp.clip(jnp.dot(x, p["wls"], precision=hp) + p["bls"],
                      LOG_SIG_MIN, LOG_SIG_MAX)
    return mu, logstd


if __name__ == "__main__":
    # Module-default hidden_dim=256 (multiple of 256: fills the v6e/v7x MXU and
    # is lane-dense everywhere).  B=16 exercises a 2-step batch grid.
    B, STATE_DIM, ACTION_DIM, HIDDEN_DIM = 16, 16, 6, 256

    key = jax.random.PRNGKey(0)
    k_state, k_params = jax.random.split(key)

    state = jax.random.normal(k_state, (B, STATE_DIM), jnp.float32)
    params = init_params(k_params, STATE_DIM, ACTION_DIM, HIDDEN_DIM)
    mu_ref, logstd_ref = reference_forward(state, params)

    # ---- f32 matmul operands (v5e default) — tight tolerance -----------------
    prepped_f32 = prepare_params(params, compute_dtype=jnp.float32)
    mu, logstd = gaussian_policy_forward(state, prepped_f32, ACTION_DIM,
                                         block_b=1024)
    jax.block_until_ready((mu, logstd))
    assert mu.shape == (B, ACTION_DIM) and logstd.shape == (B, ACTION_DIM)
    assert jnp.allclose(mu, mu_ref, atol=1e-4, rtol=1e-4), "mu mismatch (f32)"
    assert jnp.allclose(logstd, logstd_ref, atol=1e-4, rtol=1e-4), "logstd mismatch (f32)"

    # ---- bf16 matmul operands (v6e/v7x default) — f32 accumulation/epilogue,
    # validated at a looser tolerance appropriate for bf16 operands ------------
    prepped_bf16 = prepare_params(params, compute_dtype=jnp.bfloat16)
    mu_b, logstd_b = gaussian_policy_forward(state, prepped_bf16, ACTION_DIM,
                                             block_b=1024)
    jax.block_until_ready((mu_b, logstd_b))
    assert jnp.allclose(mu_b, mu_ref, atol=3e-2, rtol=3e-2), "mu mismatch (bf16)"
    assert jnp.allclose(logstd_b, logstd_ref, atol=3e-2, rtol=3e-2), "logstd mismatch (bf16)"

    # TODO(synk): .sample() (rsample + tanh-corrected log_prob) needs RNG draws;
    # it could be added with pltpu.prng_seed/stateful_normal but is outside forward().
    print("KERNEL_OK")
</pallas_src>

<mosaic_0001>
module attributes {stable_mosaic.version = 11 : i64} {
  func.func @gaussian_policy_kernel(%arg0: i32, %arg1: memref<8x16xf32, #tpu.memory_space<vmem>>, %arg2: memref<16x256xf32, #tpu.memory_space<vmem>>, %arg3: memref<1x256xf32, #tpu.memory_space<vmem>>, %arg4: memref<256x256xf32, #tpu.memory_space<vmem>>, %arg5: memref<1x256xf32, #tpu.memory_space<vmem>>, %arg6: memref<256x128xf32, #tpu.memory_space<vmem>>, %arg7: memref<1x128xf32, #tpu.memory_space<vmem>>, %arg8: memref<8x128xf32, #tpu.memory_space<vmem>>) attributes {dimension_semantics = [#tpu.dimension_semantics<parallel>], iteration_bounds = array<i64: 2>, scalar_prefetch = 0 : i64, scratch_operands = 0 : i64, tpu.core_type = #tpu.core_type<tc>, window_params = [{transform_indices = @transform_0, window_bounds = array<i64: 8, 16>}, {pipeline_mode = #tpu.pipeline_mode<synchronous>, transform_indices = @transform_1, window_bounds = array<i64: 16, 256>}, {pipeline_mode = #tpu.pipeline_mode<synchronous>, transform_indices = @transform_2, window_bounds = array<i64: 1, 256>}, {pipeline_mode = #tpu.pipeline_mode<synchronous>, transform_indices = @transform_3, window_bounds = array<i64: 256, 256>}, {pipeline_mode = #tpu.pipeline_mode<synchronous>, transform_indices = @transform_4, window_bounds = array<i64: 1, 256>}, {pipeline_mode = #tpu.pipeline_mode<synchronous>, transform_indices = @transform_5, window_bounds = array<i64: 256, 128>}, {pipeline_mode = #tpu.pipeline_mode<synchronous>, transform_indices = @transform_6, window_bounds = array<i64: 1, 128>}, {transform_indices = @transform_7, window_bounds = array<i64: 8, 128>}]} {
    %c0 = arith.constant 0 : index
    %c0_0 = arith.constant 0 : index
    %0 = vector.load %arg1[%c0, %c0_0] : memref<8x16xf32, #tpu.memory_space<vmem>>, vector<8x16xf32>
    %c0_1 = arith.constant 0 : index
    %c0_2 = arith.constant 0 : index
    %1 = vector.load %arg2[%c0_1, %c0_2] : memref<16x256xf32, #tpu.memory_space<vmem>>, vector<16x256xf32>
    %cst = arith.constant dense<0.000000e+00> : vector<8x256xf32>
    %2 = tpu.matmul %0, %1, %cst {dimension_numbers = #tpu.dot_dimension_numbers<[1], [0], [0], [1], [0, 0, 1, 1], [], []>} : vector<8x16xf32>, vector<16x256xf32>, vector<8x256xf32> -> vector<8x256xf32>
    %c0_3 = arith.constant 0 : index
    %c0_4 = arith.constant 0 : index
    %3 = vector.load %arg3[%c0_3, %c0_4] : memref<1x256xf32, #tpu.memory_space<vmem>>, vector<1x256xf32>
    %4 = vector.broadcast %3 : vector<1x256xf32> to vector<8x256xf32>
    %5 = arith.addf %2, %4 : vector<8x256xf32>
    %cst_5 = arith.constant 0.000000e+00 : f32
    %6 = vector.broadcast %cst_5 : f32 to vector<8x256xf32>
    %7 = arith.maximumf %5, %6 : vector<8x256xf32>
    %c0_6 = arith.constant 0 : index
    %c0_7 = arith.constant 0 : index
    %8 = vector.load %arg4[%c0_6, %c0_7] : memref<256x256xf32, #tpu.memory_space<vmem>>, vector<256x256xf32>
    %cst_8 = arith.constant dense<0.000000e+00> : vector<8x256xf32>
    %9 = tpu.matmul %7, %8, %cst_8 {dimension_numbers = #tpu.dot_dimension_numbers<[1], [0], [0], [1], [0, 0, 1, 1], [], []>} : vector<8x256xf32>, vector<256x256xf32>, vector<8x256xf32> -> vector<8x256xf32>
    %c0_9 = arith.constant 0 : index
    %c0_10 = arith.constant 0 : index
    %10 = vector.load %arg5[%c0_9, %c0_10] : memref<1x256xf32, #tpu.memory_space<vmem>>, vector<1x256xf32>
    %11 = vector.broadcast %10 : vector<1x256xf32> to vector<8x256xf32>
    %12 = arith.addf %9, %11 : vector<8x256xf32>
    %cst_11 = arith.constant 0.000000e+00 : f32
    %13 = vector.broadcast %cst_11 : f32 to vector<8x256xf32>
    %14 = arith.maximumf %12, %13 : vector<8x256xf32>
    %c0_12 = arith.constant 0 : index
    %c0_13 = arith.constant 0 : index
    %15 = vector.load %arg6[%c0_12, %c0_13] : memref<256x128xf32, #tpu.memory_space<vmem>>, vector<256x128xf32>
    %cst_14 = arith.constant dense<0.000000e+00> : vector<8x128xf32>
    %16 = tpu.matmul %14, %15, %cst_14 {dimension_numbers = #tpu.dot_dimension_numbers<[1], [0], [0], [1], [0, 0, 1, 1], [], []>} : vector<8x256xf32>, vector<256x128xf32>, vector<8x128xf32> -> vector<8x128xf32>
    %c0_15 = arith.constant 0 : index
    %c0_16 = arith.constant 0 : index
    %17 = vector.load %arg7[%c0_15, %c0_16] : memref<1x128xf32, #tpu.memory_space<vmem>>, vector<1x128xf32>
    %18 = vector.broadcast %17 : vector<1x128xf32> to vector<8x128xf32>
    %19 = arith.addf %16, %18 : vector<8x128xf32>
    %20 = tpu.iota {dimensions = array<i32: 1>} : vector<8x128xi32>
    %c6_i32 = arith.constant 6 : i32
    %21 = vector.broadcast %c6_i32 : i32 to vector<8x128xi32>
    %22 = arith.cmpi slt, %20, %21 : vector<8x128xi32>
    %23 = math.tanh %19 : vector<8x128xf32>
    %cst_17 = arith.constant -2.000000e+01 : f32
    %cst_18 = arith.constant 2.000000e+00 : f32
    %24 = vector.broadcast %cst_17 : f32 to vector<8x128xf32>
    %25 = arith.maximumf %24, %19 : vector<8x128xf32>
    %26 = vector.broadcast %cst_18 : f32 to vector<8x128xf32>
    %27 = arith.minimumf %26, %25 : vector<8x128xf32>
    %28 = arith.select %22, %23, %27 : vector<8x128xi1>, vector<8x128xf32>
    %c0_19 = arith.constant 0 : index
    %c0_20 = arith.constant 0 : index
    %29 = vector.load %arg8[%c0_19, %c0_20] : memref<8x128xf32, #tpu.memory_space<vmem>>, vector<8x128xf32>
    tpu.vector_store %arg8[%c0_19, %c0_20], %28 {strides = array<i32>} : memref<8x128xf32, #tpu.memory_space<vmem>>, vector<8x128xf32>,
    return
  }
  func.func @transform_0(%arg0: i32) -> (i32, i32) {
    %c0_i32 = arith.constant 0 : i32
    %c0_i32_0 = arith.constant 0 : i32
    return %arg0, %c0_i32 : i32, i32
  }
  func.func @transform_1(%arg0: i32) -> (i32, i32) {
    %c0_i32 = arith.constant 0 : i32
    %c0_i32_0 = arith.constant 0 : i32
    %c0_i32_1 = arith.constant 0 : i32
    return %c0_i32, %c0_i32_0 : i32, i32
  }
  func.func @transform_2(%arg0: i32) -> (i32, i32) {
    %c0_i32 = arith.constant 0 : i32
    %c0_i32_0 = arith.constant 0 : i32
    %c0_i32_1 = arith.constant 0 : i32
    return %c0_i32, %c0_i32_0 : i32, i32
  }
  func.func @transform_3(%arg0: i32) -> (i32, i32) {
    %c0_i32 = arith.constant 0 : i32
    %c0_i32_0 = arith.constant 0 : i32
    %c0_i32_1 = arith.constant 0 : i32
    return %c0_i32, %c0_i32_0 : i32, i32
  }
  func.func @transform_4(%arg0: i32) -> (i32, i32) {
    %c0_i32 = arith.constant 0 : i32
    %c0_i32_0 = arith.constant 0 : i32
    %c0_i32_1 = arith.constant 0 : i32
    return %c0_i32, %c0_i32_0 : i32, i32
  }
  func.func @transform_5(%arg0: i32) -> (i32, i32) {
    %c0_i32 = arith.constant 0 : i32
    %c0_i32_0 = arith.constant 0 : i32
    %c0_i32_1 = arith.constant 0 : i32
    return %c0_i32, %c0_i32_0 : i32, i32
  }
  func.func @transform_6(%arg0: i32) -> (i32, i32) {
    %c0_i32 = arith.constant 0 : i32
    %c0_i32_0 = arith.constant 0 : i32
    %c0_i32_1 = arith.constant 0 : i32
    return %c0_i32, %c0_i32_0 : i32, i32
  }
  func.func @transform_7(%arg0: i32) -> (i32, i32) {
    %c0_i32 = arith.constant 0 : i32
    %c0_i32_0 = arith.constant 0 : i32
    return %arg0, %c0_i32 : i32, i32
  }
}

</mosaic_0001>

<llo_original>
// kernel: tpu_custom_call.1
$region0: #{tpu_custom_call.1}
  #allocation0 [shape = 'u32[]', space=smem, size = 0x4, offset = 0x4, fixed_abs, tag = 'smem constant byte address 0x4 - core index']
  #allocation1 [shape = 'u32[144,128]{1,0:T(1,128)}', space=vmem, size = 0x12000, scoped, tag = 'internal scratch']
  %s0 = inlined_call_operand.hbm [shape: f32[16,16], index: 0, kind: input, shape index: {}]
  %s1 = inlined_call_operand.hbm [shape: f32[16,256], index: 1, kind: input, shape index: {}]
  %s2 = inlined_call_operand.vmem [shape: f32[1,256], index: 2, kind: input, shape index: {}]
  %s3 = inlined_call_operand.hbm [shape: f32[256,256], index: 3, kind: input, shape index: {}]
  %s4 = inlined_call_operand.vmem [shape: f32[1,256], index: 4, kind: input, shape index: {}]
  %s5 = inlined_call_operand.hbm [shape: f32[256,128], index: 5, kind: input, shape index: {}]
  %s6 = inlined_call_operand.vmem [shape: f32[1,128], index: 6, kind: input, shape index: {}]
  %s7 = inlined_call_operand.hbm [shape: f32[16,128], index: 7, kind: output, shape index: {}]
  %s8 = sld [smem:[#allocation0]]
  $region77: #{tpu_custom_call.1} parent=0
    _
  %s10 = ssub.s32 1, %s8
  %s11 = scalar_select 0, %s10, %s8
  $region1: #{tpu_custom_call.1} parent=0
    #allocation2 [shape = 'u8[8192]{0}', space=vmem, size = 0x2000, scoped, tag = 'input window, operand 0']
    #allocation3 [shape = 's32[2]{0}', space=sflag, size = 0x8, scoped, tag = 'scoped memory for tpu_custom_call.1']
    #allocation4 [shape = 's32[2]{0}', space=sflag, size = 0x8, scoped, tag = 'scoped memory for tpu_custom_call.1']
    #allocation5 [shape = 'u8[16384]{0}', space=vmem, size = 0x4000, scoped, tag = 'input window, operand 1, single buffered']
    #allocation6 [shape = 's32[1]{0}', space=sflag, size = 0x4, scoped, tag = 'scoped memory for tpu_custom_call.1']
    #allocation7 [shape = 'u8[262144]{0}', space=vmem, size = 0x40000, scoped, tag = 'input window, operand 3, single buffered']
    #allocation8 [shape = 'u8[131072]{0}', space=vmem, size = 0x20000, scoped, tag = 'input window, operand 5, single buffered']
    #allocation9 [shape = 's32[1]{0}', space=sflag, size = 0x4, scoped, tag = 'scoped memory for tpu_custom_call.1']
    #allocation10 [shape = 'u8[8192]{0}', space=vmem, size = 0x2000, scoped, tag = 'output window, operand 0']
    %12 = vsyncpa [#allocation3], 0
    %s13 = scalar_lea.sflag [#allocation3], 1
    %14 = vsyncpa %s13, 0
    %15 = vsyncpa [#allocation6], 0
    %16 = vsyncpa [#allocation9], 0
    %17 = vsyncpa [#allocation4], 0
    %s18 = scalar_lea.sflag [#allocation4], 1
    %19 = vsyncpa %s18, 0
    loop: start=0, step=1, limit=4
    $region2: #{tpu_custom_call.1} parent=1 // loop_pre_header
      _
    $region3: #{tpu_custom_call.1} parent=1 // loop_header
      %s21 = sphi 0, %s25
      %p22 = scmp.ge.s32.totalorder %s21, 4
      %s31 = sphi 0, %s33
      %s34 = sphi 0, %s31
      %s35 = sphi 0, %s34
      %s51 = sphi 0, %s35
      %s55 = sphi 0, %s55
      %s57 = sphi 0, %s55
      %s58 = sphi 0, %s57
      %s72 = sphi 0, %s58
      %s76 = sphi 0, %s76
      %s78 = sphi 0, %s76
      %s79 = sphi 0, %s78
      %s93 = sphi 0, %s79
      %s97 = sphi 0, %s97
      %s99 = sphi 0, %s97
      %s100 = sphi 0, %s99
      %s114 = sphi 0, %s100
      %s118 = sphi 0, %s118
      %s120 = sphi 0, %s118
      %s121 = sphi 0, %s120
      %s135 = sphi 0, %s121
      %s139 = sphi 0, %s139
      %s141 = sphi 0, %s139
      %s142 = sphi 0, %s141
      %s156 = sphi 0, %s142
      %s160 = sphi 0, %s160
      %s162 = sphi 0, %s160
      %s163 = sphi 0, %s162
      %s177 = sphi 0, %s163
      %s183 = sphi 0, %s185
      %s186 = sphi 0, %s183
      %s187 = sphi 0, %s186
      %s203 = sphi 0, %s187
    $region4: #{tpu_custom_call.1} parent=1 // loop_header_branch
      %24 = sbr.rel (%p22) target = $region8
    $region5: #{tpu_custom_call.1} parent=1 // loop_body
      %s26 = ssub.s32 %s21, 1
      %s27 = ssub.s32 %s21, 2
      %s28 = sadd.s32 %s21, 1
      %s29 = ssub.s32 %s21, %s28
      %p30 = scmp.eq.s32.totalorder %s29, 0
      %s32 = sadd.s32 %s31, 1
      %s33 = scalar_select %p30, %s31, %s32
      %p36 = pneg %p30
      %p37 = scmp.eq.s32.totalorder %s21, 1
      %p38 = por %p36, %p37
      %p39 = scmp.ne.s32.totalorder %s31, %s34
      %p40 = scmp.eq.s32.totalorder %s21, 0
      %p41 = por %p39, %p40
      %p42 = scmp.ne.s32.totalorder %s31, %s34
      %p43 = scmp.eq.s32.totalorder %s26, 1
      %p44 = por %p42, %p43
      %p45 = scmp.ne.s32.totalorder %s34, %s35
      %p46 = scmp.eq.s32.totalorder %s26, 0
      %p47 = por %p45, %p46
      %p48 = scmp.ne.s32.totalorder %s34, %s35
      %p49 = scmp.eq.s32.totalorder %s27, 1
      %p50 = por %p48, %p49
      %p52 = scmp.ne.s32.totalorder %s35, %s51
      %p53 = scmp.eq.s32.totalorder %s27, 0
      %p54 = por %p52, %p53
      %s56 = sadd.s32 %s55, 1
      %p59 = scmp.eq.s32.totalorder %s21, 1
      %p60 = scmp.ne.s32.totalorder %s55, %s57
      %p61 = scmp.eq.s32.totalorder %s21, 0
      %p62 = por %p60, %p61
      %p63 = scmp.ne.s32.totalorder %s55, %s57
      %p64 = scmp.eq.s32.totalorder %s26, 1
      %p65 = por %p63, %p64
      %p66 = scmp.ne.s32.totalorder %s57, %s58
      %p67 = scmp.eq.s32.totalorder %s26, 0
      %p68 = por %p66, %p67
      %p69 = scmp.ne.s32.totalorder %s57, %s58
      %p70 = scmp.eq.s32.totalorder %s27, 1
      %p71 = por %p69, %p70
      %p73 = scmp.ne.s32.totalorder %s58, %s72
      %p74 = scmp.eq.s32.totalorder %s27, 0
      %p75 = por %p73, %p74
      %s77 = sadd.s32 %s76, 1
      %p80 = scmp.eq.s32.totalorder %s21, 1
      %p81 = scmp.ne.s32.totalorder %s76, %s78
      %p82 = scmp.eq.s32.totalorder %s21, 0
      %p83 = por %p81, %p82
      %p84 = scmp.ne.s32.totalorder %s76, %s78
      %p85 = scmp.eq.s32.totalorder %s26, 1
      %p86 = por %p84, %p85
      %p87 = scmp.ne.s32.totalorder %s78, %s79
      %p88 = scmp.eq.s32.totalorder %s26, 0
      %p89 = por %p87, %p88
      %p90 = scmp.ne.s32.totalorder %s78, %s79
      %p91 = scmp.eq.s32.totalorder %s27, 1
      %p92 = por %p90, %p91
      %p94 = scmp.ne.s32.totalorder %s79, %s93
      %p95 = scmp.eq.s32.totalorder %s27, 0
      %p96 = por %p94, %p95
      %s98 = sadd.s32 %s97, 1
      %p101 = scmp.eq.s32.totalorder %s21, 1
      %p102 = scmp.ne.s32.totalorder %s97, %s99
      %p103 = scmp.eq.s32.totalorder %s21, 0
      %p104 = por %p102, %p103
      %p105 = scmp.ne.s32.totalorder %s97, %s99
      %p106 = scmp.eq.s32.totalorder %s26, 1
      %p107 = por %p105, %p106
      %p108 = scmp.ne.s32.totalorder %s99, %s100
      %p109 = scmp.eq.s32.totalorder %s26, 0
      %p110 = por %p108, %p109
      %p111 = scmp.ne.s32.totalorder %s99, %s100
      %p112 = scmp.eq.s32.totalorder %s27, 1
      %p113 = por %p111, %p112
      %p115 = scmp.ne.s32.totalorder %s100, %s114
      %p116 = scmp.eq.s32.totalorder %s27, 0
      %p117 = por %p115, %p116
      %s119 = sadd.s32 %s118, 1
      %p122 = scmp.eq.s32.totalorder %s21, 1
      %p123 = scmp.ne.s32.totalorder %s118, %s120
      %p124 = scmp.eq.s32.totalorder %s21, 0
      %p125 = por %p123, %p124
      %p126 = scmp.ne.s32.totalorder %s118, %s120
      %p127 = scmp.eq.s32.totalorder %s26, 1
      %p128 = por %p126, %p127
      %p129 = scmp.ne.s32.totalorder %s120, %s121
      %p130 = scmp.eq.s32.totalorder %s26, 0
      %p131 = por %p129, %p130
      %p132 = scmp.ne.s32.totalorder %s120, %s121
      %p133 = scmp.eq.s32.totalorder %s27, 1
      %p134 = por %p132, %p133
      %p136 = scmp.ne.s32.totalorder %s121, %s135
      %p137 = scmp.eq.s32.totalorder %s27, 0
      %p138 = por %p136, %p137
      %s140 = sadd.s32 %s139, 1
      %p143 = scmp.eq.s32.totalorder %s21, 1
      %p144 = scmp.ne.s32.totalorder %s139, %s141
      %p145 = scmp.eq.s32.totalorder %s21, 0
      %p146 = por %p144, %p145
      %p147 = scmp.ne.s32.totalorder %s139, %s141
      %p148 = scmp.eq.s32.totalorder %s26, 1
      %p149 = por %p147, %p148
      %p150 = scmp.ne.s32.totalorder %s141, %s142
      %p151 = scmp.eq.s32.totalorder %s26, 0
      %p152 = por %p150, %p151
      %p153 = scmp.ne.s32.totalorder %s141, %s142
      %p154 = scmp.eq.s32.totalorder %s27, 1
      %p155 = por %p153, %p154
      %p157 = scmp.ne.s32.totalorder %s142, %s156
      %p158 = scmp.eq.s32.totalorder %s27, 0
      %p159 = por %p157, %p158
      %s161 = sadd.s32 %s160, 1
      %p164 = scmp.eq.s32.totalorder %s21, 1
      %p165 = scmp.ne.s32.totalorder %s160, %s162
      %p166 = scmp.eq.s32.totalorder %s21, 0
      %p167 = por %p165, %p166
      %p168 = scmp.ne.s32.totalorder %s160, %s162
      %p169 = scmp.eq.s32.totalorder %s26, 1
      %p170 = por %p168, %p169
      %p171 = scmp.ne.s32.totalorder %s162, %s163
      %p172 = scmp.eq.s32.totalorder %s26, 0
      %p173 = por %p171, %p172
      %p174 = scmp.ne.s32.totalorder %s162, %s163
      %p175 = scmp.eq.s32.totalorder %s27, 1
      %p176 = por %p174, %p175
      %p178 = scmp.ne.s32.totalorder %s163, %s177
      %p179 = scmp.eq.s32.totalorder %s27, 0
      %p180 = por %p178, %p179
      %s181 = ssub.s32 %s21, %s28
      %p182 = scmp.eq.s32.totalorder %s181, 0
      %s184 = sadd.s32 %s183, 1
      %s185 = scalar_select %p182, %s183, %s184
      %p188 = pneg %p182
      %p189 = scmp.eq.s32.totalorder %s21, 1
      %p190 = por %p188, %p189
      %p191 = scmp.ne.s32.totalorder %s183, %s186
      %p192 = scmp.eq.s32.totalorder %s21, 0
      %p193 = por %p191, %p192
      %p194 = scmp.ne.s32.totalorder %s183, %s186
      %p195 = scmp.eq.s32.totalorder %s26, 1
      %p196 = por %p194, %p195
      %p197 = scmp.ne.s32.totalorder %s186, %s187
      %p198 = scmp.eq.s32.totalorder %s26, 0
      %p199 = por %p197, %p198
      %p200 = scmp.ne.s32.totalorder %s186, %s187
      %p201 = scmp.eq.s32.totalorder %s27, 1
      %p202 = por %p200, %p201
      %p204 = scmp.ne.s32.totalorder %s187, %s203
      %p205 = scmp.eq.s32.totalorder %s27, 0
      %p206 = por %p204, %p205
      %p207 = scmp.le.s32.totalorder 1, %s21
      %p208 = scmp.lt.s32.totalorder %s21, 3
      %p209 = pnand %p207, %p208
      %p210 = pneg %p209
      // Predicated region
      $region9: #{tpu_custom_call.1} parent=5 // pred_check
        _
      $region10: #{tpu_custom_call.1} parent=5 // pred_check_branch
        %212 = sbr.rel (%p209) target = $region12
      $region11: #{tpu_custom_call.1} parent=5 // pred_region
        %s213 = ssub.s32 %s21, 1
        // Predicated region
        $region13: #{tpu_custom_call.1} parent=11 // pred_check
          %p214 = pneg %p68
        $region14: #{tpu_custom_call.1} parent=11 // pred_check_branch
          %216 = sbr.rel (%p214) target = $region16
        $region15: #{tpu_custom_call.1} parent=11 // pred_region
          %s218 = ssub.s32 512, 512
          %219 = vsyncadd [#allocation6], %s218
          %s220 = sshll.u32 [#allocation5], 4
          %s221 = int_to_ptr.vmem [resolvable:$true] %s220
          %226 = dma.hbm_to_vmem [thread:$0]  %s1, 512, %s221, [#allocation6], 256, 256, 16
        $region16: #{tpu_custom_call.1} parent=11 // pred_fallthru
          _
        // Predicated region
        $region17: #{tpu_custom_call.1} parent=11 // pred_check
          %p227 = pneg %p89
        $region18: #{tpu_custom_call.1} parent=11 // pred_check_branch
          %229 = sbr.rel (%p227) target = $region20
        $region19: #{tpu_custom_call.1} parent=11 // pred_region
          _
        $region20: #{tpu_custom_call.1} parent=11 // pred_fallthru
          _
        // Predicated region
        $region21: #{tpu_custom_call.1} parent=11 // pred_check
          %p230 = pneg %p110
        $region22: #{tpu_custom_call.1} parent=11 // pred_check_branch
          %232 = sbr.rel (%p230) target = $region24
        $region23: #{tpu_custom_call.1} parent=11 // pred_region
          %s234 = ssub.s32 8192, 8192
          %235 = vsyncadd [#allocation6], %s234
          %s236 = sshll.u32 [#allocation7], 4
          %s237 = int_to_ptr.vmem [resolvable:$true] %s236
          %242 = dma.hbm_to_vmem [thread:$0]  %s3, 8192, %s237, [#allocation6], 256, 256, 16
        $region24: #{tpu_custom_call.1} parent=11 // pred_fallthru
          _
        // Predicated region
        $region25: #{tpu_custom_call.1} parent=11 // pred_check
          %p243 = pneg %p131
        $region26: #{tpu_custom_call.1} parent=11 // pred_check_branch
          %245 = sbr.rel (%p243) target = $region28
        $region27: #{tpu_custom_call.1} parent=11 // pred_region
          _
        $region28: #{tpu_custom_call.1} parent=11 // pred_fallthru
          _
        // Predicated region
        $region29: #{tpu_custom_call.1} parent=11 // pred_check
          %p246 = pneg %p152
        $region30: #{tpu_custom_call.1} parent=11 // pred_check_branch
          %248 = sbr.rel (%p246) target = $region32
        $region31: #{tpu_custom_call.1} parent=11 // pred_region
          %s250 = ssub.s32 4096, 4096
          %251 = vsyncadd [#allocation9], %s250
          %s252 = sshll.u32 [#allocation8], 4
          %s253 = int_to_ptr.vmem [resolvable:$true] %s252
          %258 = dma.hbm_to_vmem [thread:$0]  %s5, 4096, %s253, [#allocation9], 128, 128, 8
        $region32: #{tpu_custom_call.1} parent=11 // pred_fallthru
          _
        // Predicated region
        $region33: #{tpu_custom_call.1} parent=11 // pred_check
          %p259 = pneg %p173
        $region34: #{tpu_custom_call.1} parent=11 // pred_check_branch
          %261 = sbr.rel (%p259) target = $region36
        $region35: #{tpu_custom_call.1} parent=11 // pred_region
          _
        $region36: #{tpu_custom_call.1} parent=11 // pred_fallthru
          _
      $region12: #{tpu_custom_call.1} parent=5 // pred_fallthru
        _
      %p262 = scmp.lt.s32.totalorder %s21, 2
      // Predicated region
      $region37: #{tpu_custom_call.1} parent=5 // pred_check
        %p263 = pneg %p262
      $region38: #{tpu_custom_call.1} parent=5 // pred_check_branch
        %265 = sbr.rel (%p263) target = $region40
      $region39: #{tpu_custom_call.1} parent=5 // pred_region
        // Predicated region
        $region41: #{tpu_custom_call.1} parent=39 // pred_check
          %p266 = pneg %p41
        $region42: #{tpu_custom_call.1} parent=39 // pred_check_branch
          %268 = sbr.rel (%p266) target = $region44
        $region43: #{tpu_custom_call.1} parent=39 // pred_region
          %s269 = sand.u32 %s31, 1
          %s270 = scalar_lea.sflag [#allocation3], %s269
          %s271 = sand.u32 %s31, 1
          %s272 = smul.addr %s271, 8
          %s273 = scalar_lea.vmem [#allocation2], %s272
          %s275 = ssub.s32 128, 128
          %276 = vsyncadd %s270, %s275
          %s277 = smul.addr %s21, 128
          %s278 = scalar_lea.hbm %s0, %s277
          %s280 = sshll.u32 %s273, 4
          %s281 = int_to_ptr.vmem [resolvable:$true] %s280
          %283 = dma.hbm_to_vmem [thread:$0]  %s278, 128, %s281, %s270
        $region44: #{tpu_custom_call.1} parent=39 // pred_fallthru
          _
      $region40: #{tpu_custom_call.1} parent=5 // pred_fallthru
        _
      %p284 = scmp.le.s32.totalorder 1, %s21
      %p285 = scmp.lt.s32.totalorder %s21, 3
      %p286 = pnand %p284, %p285
      %p287 = pneg %p286
      // Predicated region
      $region45: #{tpu_custom_call.1} parent=5 // pred_check
        _
      $region46: #{tpu_custom_call.1} parent=5 // pred_check_branch
        %289 = sbr.rel (%p286) target = $region48
      $region47: #{tpu_custom_call.1} parent=5 // pred_region
        %s290 = ssub.s32 %s21, 1
        %s291 = sand.u32 %s34, 1
        %s292 = scalar_lea.sflag [#allocation3], %s291
        %s293 = sand.u32 %s34, 1
        %s294 = smul.addr %s293, 8
        %s295 = scalar_lea.vmem [#allocation2], %s294
        // Predicated region
        $region49: #{tpu_custom_call.1} parent=47 // pred_check
          %p296 = pneg %p47
        $region50: #{tpu_custom_call.1} parent=47 // pred_check_branch
          %298 = sbr.rel (%p296) target = $region52
        $region51: #{tpu_custom_call.1} parent=47 // pred_region
          %299 = dma.done %s292, 128
        $region52: #{tpu_custom_call.1} parent=47 // pred_fallthru
          _
        // Predicated region
        $region53: #{tpu_custom_call.1} parent=47 // pred_check
          %p300 = pneg %p68
        $region54: #{tpu_custom_call.1} parent=47 // pred_check_branch
          %302 = sbr.rel (%p300) target = $region56
        $region55: #{tpu_custom_call.1} parent=47 // pred_region
          %303 = dma.done [#allocation6], 512
        $region56: #{tpu_custom_call.1} parent=47 // pred_fallthru
          _
        // Predicated region
        $region57: #{tpu_custom_call.1} parent=47 // pred_check
          %p304 = pneg %p110
        $region58: #{tpu_custom_call.1} parent=47 // pred_check_branch
          %306 = sbr.rel (%p304) target = $region60
        $region59: #{tpu_custom_call.1} parent=47 // pred_region
          %307 = dma.done [#allocation6], 8192
        $region60: #{tpu_custom_call.1} parent=47 // pred_fallthru
          _
        // Predicated region
        $region61: #{tpu_custom_call.1} parent=47 // pred_check
          %p308 = pneg %p152
        $region62: #{tpu_custom_call.1} parent=47 // pred_check_branch
          %310 = sbr.rel (%p308) target = $region64
        $region63: #{tpu_custom_call.1} parent=47 // pred_region
          %311 = dma.done [#allocation9], 4096
        $region64: #{tpu_custom_call.1} parent=47 // pred_fallthru
          _
        %s312 = sand.u32 %s34, 1
        %s313 = scalar_lea.sflag [#allocation3], %s312
        %s314 = sand.u32 %s34, 1
        %s315 = smul.addr %s314, 8
        %s316 = scalar_lea.vmem [#allocation2], %s315
        %p317 = pneg %p47
        %p318 = pneg %p44
        %p319 = pneg %p68
        %p320 = pneg %p65
        %p321 = pneg %p89
        %p322 = pneg %p86
        %p323 = pneg %p110
        %p324 = pneg %p107
        %p325 = pneg %p131
        %p326 = pneg %p128
        %p327 = pneg %p152
        %p328 = pneg %p149
        %p329 = pneg %p173
        %p330 = pneg %p170
        %p331 = pneg %p199
        %p332 = pneg %p196
        %s333 = sand.u32 %s186, 1
        %s334 = scalar_lea.sflag [#allocation4], %s333
        %s335 = sand.u32 %s186, 1
        %s336 = smul.addr %s335, 8
        %s337 = scalar_lea.vmem [#allocation10], %s336
        %v338 = vld [vmem:[%s295] sm:$0xff]
        %v339 = vld [vmem:[#allocation5] sm:$0xff]
        %v340 = vld [vmem:[#allocation5 + $0x8] sm:$0xff]
        %v341 = vld [vmem:[#allocation5 + $0x10] sm:$0xff]
        %v342 = vld [vmem:[#allocation5 + $0x18] sm:$0xff]
        %v343 = vld [vmem:[%s2] sm:$0x3]
        %v345 = vlaneseq
        %v346 = vshrl.u32 %v345, 7
        %v347 = vsub.s32 0, %v346
        %v348 = vrot.slane %v343, %v347
        %v349 = vlaneseq
        %v350 = vshrl.u32 %v349, 7
        %v351 = vsub.s32 1, %v350
        %v352 = vrot.slane %v343, %v351
        %vm355 = vcmask 130048
        %v357 = vsel %vm355, %v338, 0
        %359 = vmatprep.subr.mxu0 %v340
        %360 = vmatpush1.msra.mxu0 %v339
        %361 = vmatprep.subr.mxu0 %v342
        %362 = vmatpush1.msra.mxu0 %v341
        %363 = vmatprep.subr.mxu0 0.0
        %364 = vmatpush1.msra.mxu0 0.0
        %365 = vmatprep.subr.mxu0 0.0
        %366 = vmatpush1.msra.mxu0 0.0
        %367 = vmatprep.subr.mxu0 0.0
        %368 = vmatpush1.msra.mxu0 0.0
        %369 = vmatprep.subr.mxu0 0.0
        %370 = vmatpush1.msra.mxu0 0.0
        %371 = vmatprep.subr.mxu0 0.0
        %372 = vmatpush1.msra.mxu0 0.0
        %373 = vmatprep.subr.mxu0 0.0
        %374 = vmatpush1.msra.mxu0 0.0
        %375 = vmatprep.subr.mxu0 0.0
        %376 = vmatpush1.msra.mxu0 0.0
        %377 = vmatprep.subr.mxu0 0.0
        %378 = vmatpush1.msra.mxu0 0.0
        %379 = vmatprep.subr.mxu0 0.0
        %380 = vmatpush1.msra.mxu0 0.0
        %381 = vmatprep.subr.mxu0 0.0
        %382 = vmatpush1.msra.mxu0 0.0
        %383 = vmatprep.subr.mxu0 0.0
        %384 = vmatpush1.msra.mxu0 0.0
        %385 = vmatprep.subr.mxu0 0.0
        %386 = vmatpush1.msra.mxu0 0.0
        %387 = vmatprep.subr.mxu0 0.0
        %388 = vmatpush1.msra.mxu0 0.0
        %389 = vmatprep.subr.mxu0 0.0
        %390 = vmatpush1.msra.mxu0 0.0
        %391 = vmatprep.subr.mxu0 0.0
        %392 = vmatpush1.msra.mxu0 0.0
        %393 = vmatprep.subr.mxu0 0.0
        %394 = vmatpush1.msra.mxu0 0.0
        %395 = vmatprep.subr.mxu0 0.0
        %396 = vmatpush1.msra.mxu0 0.0
        %397 = vmatprep.subr.mxu0 0.0
        %398 = vmatpush1.msra.mxu0 0.0
        %399 = vmatprep.subr.mxu0 0.0
        %400 = vmatpush1.msra.mxu0 0.0
        %401 = vmatprep.subr.mxu0 0.0
        %402 = vmatpush1.msra.mxu0 0.0
        %403 = vmatprep.subr.mxu0 0.0
        %404 = vmatpush1.msra.mxu0 0.0
        %405 = vmatprep.subr.mxu0 0.0
        %406 = vmatpush1.msra.mxu0 0.0
        %407 = vmatprep.subr.mxu0 0.0
        %408 = vmatpush1.msra.mxu0 0.0
        %409 = vmatprep.subr.mxu0 0.0
        %410 = vmatpush1.msra.mxu0 0.0
        %411 = vmatprep.subr.mxu0 0.0
        %412 = vmatpush1.msra.mxu0 0.0
        %413 = vmatprep.subr.mxu0 0.0
        %414 = vmatpush1.msra.mxu0 0.0
        %415 = vmatprep.subr.mxu0 0.0
        %416 = vmatpush1.msra.mxu0 0.0
        %417 = vmatprep.subr.mxu0 0.0
        %418 = vmatpush1.msra.mxu0 0.0
        %419 = vmatprep.subr.mxu0 0.0
        %420 = vmatpush1.msra.mxu0 0.0
        %421 = vmatprep.subr.mxu0 0.0
        %422 = vmatpush1.msra.mxu0 0.0
        %423 = vmatprep.mubr.f32.mxu0 0.0
        %424 = vmatmul.mubr.f32.gmra.mrb[0].mxu0 %v357
        %v425 = vpop.f32.mrb[0].mxu0
        %v426 = vadd.f32 %v348, %v425
        %v427 = vpop.f32.mrb[0].mxu0
        %v428 = vadd.f32 %v352, %v427
        %429 = vdwg.mxu0
        %v430 = vmax.f32 %v426, 0.0
        %v431 = vmax.f32 %v428, 0.0
        %v432 = vld [vmem:[#allocation7] sm:$0xff]
        %v433 = vld [vmem:[#allocation7 + $0x8] sm:$0xff]
        %v434 = vld [vmem:[#allocation7 + $0x10] sm:$0xff]
        %v435 = vld [vmem:[#allocation7 + $0x18] sm:$0xff]
        %v436 = vld [vmem:[#allocation7 + $0x20] sm:$0xff]
        %v437 = vld [vmem:[#allocation7 + $0x28] sm:$0xff]
        %v438 = vld [vmem:[#allocation7 + $0x30] sm:$0xff]
        %v439 = vld [vmem:[#allocation7 + $0x38] sm:$0xff]
        %v440 = vld [vmem:[#allocation7 + $0x40] sm:$0xff]
        %v441 = vld [vmem:[#allocation7 + $0x48] sm:$0xff]
        %v442 = vld [vmem:[#allocation7 + $0x50] sm:$0xff]
        %v443 = vld [vmem:[#allocation7 + $0x58] sm:$0xff]
        %v444 = vld [vmem:[#allocation7 + $0x60] sm:$0xff]
        %v445 = vld [vmem:[#allocation7 + $0x68] sm:$0xff]
        %v446 = vld [vmem:[#allocation7 + $0x70] sm:$0xff]
        %v447 = vld [vmem:[#allocation7 + $0x78] sm:$0xff]
        %v448 = vld [vmem:[#allocation7 + $0x80] sm:$0xff]
        %v449 = vld [vmem:[#allocation7 + $0x88] sm:$0xff]
        %v450 = vld [vmem:[#allocation7 + $0x90] sm:$0xff]
        %v451 = vld [vmem:[#allocation7 + $0x98] sm:$0xff]
        %v452 = vld [vmem:[#allocation7 + $0xa0] sm:$0xff]
        %v453 = vld [vmem:[#allocation7 + $0xa8] sm:$0xff]
        %v454 = vld [vmem:[#allocation7 + $0xb0] sm:$0xff]
        %v455 = vld [vmem:[#allocation7 + $0xb8] sm:$0xff]
        %v456 = vld [vmem:[#allocation7 + $0xc0] sm:$0xff]
        %v457 = vld [vmem:[#allocation7 + $0xc8] sm:$0xff]
        %v458 = vld [vmem:[#allocation7 + $0xd0] sm:$0xff]
        %v459 = vld [vmem:[#allocation7 + $0xd8] sm:$0xff]
        %v460 = vld [vmem:[#allocation7 + $0xe0] sm:$0xff]
        %v461 = vld [vmem:[#allocation7 + $0xe8] sm:$0xff]
        %v462 = vld [vmem:[#allocation7 + $0xf0] sm:$0xff]
        %v463 = vld [vmem:[#allocation7 + $0xf8] sm:$0xff]
        %v464 = vld [vmem:[#allocation7 + $0x100] sm:$0xff]
        %v465 = vld [vmem:[#allocation7 + $0x108] sm:$0xff]
        %v466 = vld [vmem:[#allocation7 + $0x110] sm:$0xff]
        %v467 = vld [vmem:[#allocation7 + $0x118] sm:$0xff]
        %v468 = vld [vmem:[#allocation7 + $0x120] sm:$0xff]
        %v469 = vld [vmem:[#allocation7 + $0x128] sm:$0xff]
        %v470 = vld [vmem:[#allocation7 + $0x130] sm:$0xff]
        %v471 = vld [vmem:[#allocation7 + $0x138] sm:$0xff]
        %v472 = vld [vmem:[#allocation7 + $0x140] sm:$0xff]
        %v473 = vld [vmem:[#allocation7 + $0x148] sm:$0xff]
        %v474 = vld [vmem:[#allocation7 + $0x150] sm:$0xff]
        %v475 = vld [vmem:[#allocation7 + $0x158] sm:$0xff]
        %v476 = vld [vmem:[#allocation7 + $0x160] sm:$0xff]
        %v477 = vld [vmem:[#allocation7 + $0x168] sm:$0xff]
        %v478 = vld [vmem:[#allocation7 + $0x170] sm:$0xff]
        %v479 = vld [vmem:[#allocation7 + $0x178] sm:$0xff]
        %v480 = vld [vmem:[#allocation7 + $0x180] sm:$0xff]
        %v481 = vld [vmem:[#allocation7 + $0x188] sm:$0xff]
        %v482 = vld [vmem:[#allocation7 + $0x190] sm:$0xff]
        %v483 = vld [vmem:[#allocation7 + $0x198] sm:$0xff]
        %v484 = vld [vmem:[#allocation7 + $0x1a0] sm:$0xff]
        %v485 = vld [vmem:[#allocation7 + $0x1a8] sm:$0xff]
        %v486 = vld [vmem:[#allocation7 + $0x1b0] sm:$0xff]
        %v487 = vld [vmem:[#allocation7 + $0x1b8] sm:$0xff]
        %v488 = vld [vmem:[#allocation7 + $0x1c0] sm:$0xff]
        %v489 = vld [vmem:[#allocation7 + $0x1c8] sm:$0xff]
        %v490 = vld [vmem:[#allocation7 + $0x1d0] sm:$0xff]
        %v491 = vld [vmem:[#allocation7 + $0x1d8] sm:$0xff]
        %v492 = vld [vmem:[#allocation7 + $0x1e0] sm:$0xff]
        %v493 = vld [vmem:[#allocation7 + $0x1e8] sm:$0xff]
        %v494 = vld [vmem:[#allocation7 + $0x1f0] sm:$0xff]
        %v495 = vld [vmem:[#allocation7 + $0x1f8] sm:$0xff]
        %v496 = vld [vmem:[%s4] sm:$0x3]
        %v498 = vlaneseq
        %v499 = vshrl.u32 %v498, 7
        %v500 = vsub.s32 0, %v499
        %v501 = vrot.slane %v496, %v500
        %v502 = vlaneseq
        %v503 = vshrl.u32 %v502, 7
        %v504 = vsub.s32 1, %v503
        %v505 = vrot.slane %v496, %v504
        %508 = vmatprep.subr.mxu0 %v433
        %509 = vmatpush1.msra.mxu0 %v432
        %510 = vmatprep.subr.mxu0 %v435
        %511 = vmatpush1.msra.mxu0 %v434
        %512 = vmatprep.subr.mxu0 %v437
        %513 = vmatpush1.msra.mxu0 %v436
        %514 = vmatprep.subr.mxu0 %v439
        %515 = vmatpush1.msra.mxu0 %v438
        %516 = vmatprep.subr.mxu0 %v441
        %517 = vmatpush1.msra.mxu0 %v440
        %518 = vmatprep.subr.mxu0 %v443
        %519 = vmatpush1.msra.mxu0 %v442
        %520 = vmatprep.subr.mxu0 %v445
        %521 = vmatpush1.msra.mxu0 %v444
        %522 = vmatprep.subr.mxu0 %v447
        %523 = vmatpush1.msra.mxu0 %v446
        %524 = vmatprep.subr.mxu0 %v449
        %525 = vmatpush1.msra.mxu0 %v448
        %526 = vmatprep.subr.mxu0 %v451
        %527 = vmatpush1.msra.mxu0 %v450
        %528 = vmatprep.subr.mxu0 %v453
        %529 = vmatpush1.msra.mxu0 %v452
        %530 = vmatprep.subr.mxu0 %v455
        %531 = vmatpush1.msra.mxu0 %v454
        %532 = vmatprep.subr.mxu0 %v457
        %533 = vmatpush1.msra.mxu0 %v456
        %534 = vmatprep.subr.mxu0 %v459
        %535 = vmatpush1.msra.mxu0 %v458
        %536 = vmatprep.subr.mxu0 %v461
        %537 = vmatpush1.msra.mxu0 %v460
        %538 = vmatprep.subr.mxu0 %v463
        %539 = vmatpush1.msra.mxu0 %v462
        %540 = vmatprep.subr.mxu0 %v465
        %541 = vmatpush1.msra.mxu0 %v464
        %542 = vmatprep.subr.mxu0 %v467
        %543 = vmatpush1.msra.mxu0 %v466
        %544 = vmatprep.subr.mxu0 %v469
        %545 = vmatpush1.msra.mxu0 %v468
        %546 = vmatprep.subr.mxu0 %v471
        %547 = vmatpush1.msra.mxu0 %v470
        %548 = vmatprep.subr.mxu0 %v473
        %549 = vmatpush1.msra.mxu0 %v472
        %550 = vmatprep.subr.mxu0 %v475
        %551 = vmatpush1.msra.mxu0 %v474
        %552 = vmatprep.subr.mxu0 %v477
        %553 = vmatpush1.msra.mxu0 %v476
        %554 = vmatprep.subr.mxu0 %v479
        %555 = vmatpush1.msra.mxu0 %v478
        %556 = vmatprep.subr.mxu0 %v481
        %557 = vmatpush1.msra.mxu0 %v480
        %558 = vmatprep.subr.mxu0 %v483
        %559 = vmatpush1.msra.mxu0 %v482
        %560 = vmatprep.subr.mxu0 %v485
        %561 = vmatpush1.msra.mxu0 %v484
        %562 = vmatprep.subr.mxu0 %v487
        %563 = vmatpush1.msra.mxu0 %v486
        %564 = vmatprep.subr.mxu0 %v489
        %565 = vmatpush1.msra.mxu0 %v488
        %566 = vmatprep.subr.mxu0 %v491
        %567 = vmatpush1.msra.mxu0 %v490
        %568 = vmatprep.subr.mxu0 %v493
        %569 = vmatpush1.msra.mxu0 %v492
        %570 = vmatprep.subr.mxu0 %v495
        %571 = vmatpush1.msra.mxu0 %v494
        %572 = vmatprep.mubr.f32.mxu0 %v431
        %573 = vmatmul.mubr.f32.gmra.mrb[0].mxu0 %v430
        %v574 = vpop.f32.mrb[0].mxu0
        %v575 = vadd.f32 %v501, %v574
        %v576 = vpop.f32.mrb[0].mxu0
        %v577 = vadd.f32 %v505, %v576
        %578 = vdwg.mxu0
        %v579 = vmax.f32 %v575, 0.0
        %v580 = vmax.f32 %v577, 0.0
        %v581 = vld [vmem:[#allocation8] sm:$0xff]
        %v582 = vld [vmem:[#allocation8 + $0x8] sm:$0xff]
        %v583 = vld [vmem:[#allocation8 + $0x10] sm:$0xff]
        %v584 = vld [vmem:[#allocation8 + $0x18] sm:$0xff]
        %v585 = vld [vmem:[#allocation8 + $0x20] sm:$0xff]
        %v586 = vld [vmem:[#allocation8 + $0x28] sm:$0xff]
        %v587 = vld [vmem:[#allocation8 + $0x30] sm:$0xff]
        %v588 = vld [vmem:[#allocation8 + $0x38] sm:$0xff]
        %v589 = vld [vmem:[#allocation8 + $0x40] sm:$0xff]
        %v590 = vld [vmem:[#allocation8 + $0x48] sm:$0xff]
        %v591 = vld [vmem:[#allocation8 + $0x50] sm:$0xff]
        %v592 = vld [vmem:[#allocation8 + $0x58] sm:$0xff]
        %v593 = vld [vmem:[#allocation8 + $0x60] sm:$0xff]
        %v594 = vld [vmem:[#allocation8 + $0x68] sm:$0xff]
        %v595 = vld [vmem:[#allocation8 + $0x70] sm:$0xff]
        %v596 = vld [vmem:[#allocation8 + $0x78] sm:$0xff]
        %v597 = vld [vmem:[#allocation8 + $0x80] sm:$0xff]
        %v598 = vld [vmem:[#allocation8 + $0x88] sm:$0xff]
        %v599 = vld [vmem:[#allocation8 + $0x90] sm:$0xff]
        %v600 = vld [vmem:[#allocation8 + $0x98] sm:$0xff]
        %v601 = vld [vmem:[#allocation8 + $0xa0] sm:$0xff]
        %v602 = vld [vmem:[#allocation8 + $0xa8] sm:$0xff]
        %v603 = vld [vmem:[#allocation8 + $0xb0] sm:$0xff]
        %v604 = vld [vmem:[#allocation8 + $0xb8] sm:$0xff]
        %v605 = vld [vmem:[#allocation8 + $0xc0] sm:$0xff]
        %v606 = vld [vmem:[#allocation8 + $0xc8] sm:$0xff]
        %v607 = vld [vmem:[#allocation8 + $0xd0] sm:$0xff]
        %v608 = vld [vmem:[#allocation8 + $0xd8] sm:$0xff]
        %v609 = vld [vmem:[#allocation8 + $0xe0] sm:$0xff]
        %v610 = vld [vmem:[#allocation8 + $0xe8] sm:$0xff]
        %v611 = vld [vmem:[#allocation8 + $0xf0] sm:$0xff]
        %v612 = vld [vmem:[#allocation8 + $0xf8] sm:$0xff]
        %v613 = vld [vmem:[%s6] sm:$0x1]
        %v615 = vlaneseq
        %v616 = vshrl.u32 %v615, 7
        %v617 = vsub.s32 0, %v616
        %v618 = vrot.slane %v613, %v617
        %620 = vmatprep.subr.mxu0 0.0
        %621 = vmatpush1.msra.mxu0 %v581
        %622 = vmatprep.subr.mxu0 0.0
        %623 = vmatpush1.msra.mxu0 %v582
        %624 = vmatprep.subr.mxu0 0.0
        %625 = vmatpush1.msra.mxu0 %v583
        %626 = vmatprep.subr.mxu0 0.0
        %627 = vmatpush1.msra.mxu0 %v584
        %628 = vmatprep.subr.mxu0 0.0
        %629 = vmatpush1.msra.mxu0 %v585
        %630 = vmatprep.subr.mxu0 0.0
        %631 = vmatpush1.msra.mxu0 %v586
        %632 = vmatprep.subr.mxu0 0.0
        %633 = vmatpush1.msra.mxu0 %v587
        %634 = vmatprep.subr.mxu0 0.0
        %635 = vmatpush1.msra.mxu0 %v588
        %636 = vmatprep.subr.mxu0 0.0
        %637 = vmatpush1.msra.mxu0 %v589
        %638 = vmatprep.subr.mxu0 0.0
        %639 = vmatpush1.msra.mxu0 %v590
        %640 = vmatprep.subr.mxu0 0.0
        %641 = vmatpush1.msra.mxu0 %v591
        %642 = vmatprep.subr.mxu0 0.0
        %643 = vmatpush1.msra.mxu0 %v592
        %644 = vmatprep.subr.mxu0 0.0
        %645 = vmatpush1.msra.mxu0 %v593
        %646 = vmatprep.subr.mxu0 0.0
        %647 = vmatpush1.msra.mxu0 %v594
        %648 = vmatprep.subr.mxu0 0.0
        %649 = vmatpush1.msra.mxu0 %v595
        %650 = vmatprep.subr.mxu0 0.0
        %651 = vmatpush1.msra.mxu0 %v596
        %652 = vmatprep.subr.mxu0 0.0
        %653 = vmatpush1.msra.mxu0 %v597
        %654 = vmatprep.subr.mxu0 0.0
        %655 = vmatpush1.msra.mxu0 %v598
        %656 = vmatprep.subr.mxu0 0.0
        %657 = vmatpush1.msra.mxu0 %v599
        %658 = vmatprep.subr.mxu0 0.0
        %659 = vmatpush1.msra.mxu0 %v600
        %660 = vmatprep.subr.mxu0 0.0
        %661 = vmatpush1.msra.mxu0 %v601
        %662 = vmatprep.subr.mxu0 0.0
        %663 = vmatpush1.msra.mxu0 %v602
        %664 = vmatprep.subr.mxu0 0.0
        %665 = vmatpush1.msra.mxu0 %v603
        %666 = vmatprep.subr.mxu0 0.0
        %667 = vmatpush1.msra.mxu0 %v604
        %668 = vmatprep.subr.mxu0 0.0
        %669 = vmatpush1.msra.mxu0 %v605
        %670 = vmatprep.subr.mxu0 0.0
        %671 = vmatpush1.msra.mxu0 %v606
        %672 = vmatprep.subr.mxu0 0.0
        %673 = vmatpush1.msra.mxu0 %v607
        %674 = vmatprep.subr.mxu0 0.0
        %675 = vmatpush1.msra.mxu0 %v608
        %676 = vmatprep.subr.mxu0 0.0
        %677 = vmatpush1.msra.mxu0 %v609
        %678 = vmatprep.subr.mxu0 0.0
        %679 = vmatpush1.msra.mxu0 %v610
        %680 = vmatprep.subr.mxu0 0.0
        %681 = vmatpush1.msra.mxu0 %v611
        %682 = vmatprep.subr.mxu0 0.0
        %683 = vmatpush1.msra.mxu0 %v612
        %684 = vmatprep.mubr.f32.mxu0 %v580
        %685 = vmatmul.mubr.f32.gmra.mrb[0].mxu0 %v579
        %v686 = vpop.f32.mrb[0].mxu0
        %v687 = vadd.f32 %v618, %v686
        %v688 = vpop.f32.mrb[0].mxu0
        %689 = vdwg.mxu0
        %v690 = vlaneseq
        %v691 = vand.u32 %v690, 127
        %vm692 = vcmp.lt.s32.totalorder %v691, 6
        %v693 = vtanh.pop %v687
        %v694 = vmax.f32 %v687, -20.0
        %v695 = vmin.f32 %v694, 2.0
        %v696 = vsel %vm692, %v693, %v695
        %697 = vst [vmem:[%s337] sm:$0xff] %v696
        %s698 = sand.u32 %s186, 1
        %s699 = scalar_lea.sflag [#allocation4], %s698
        %s700 = sand.u32 %s186, 1
        %s701 = smul.addr %s700, 8
        %s702 = scalar_lea.vmem [#allocation10], %s701
        // Predicated region
        $region65: #{tpu_custom_call.1} parent=47 // pred_check
          %p703 = pneg %p196
        $region66: #{tpu_custom_call.1} parent=47 // pred_check_branch
          %705 = sbr.rel (%p703) target = $region68
        $region67: #{tpu_custom_call.1} parent=47 // pred_region
          %s707 = ssub.s32 128, 128
          %708 = vsyncadd %s699, %s707
          %s709 = smul.addr %s26, 128
          %s710 = scalar_lea.hbm %s7, %s709
          %s712 = sshll.u32 %s702, 4
          %s713 = int_to_ptr.vmem [resolvable:$true] %s712
          %715 = dma.vmem_to_hbm [thread:$0]  %s713, 128, %s710, %s699
        $region68: #{tpu_custom_call.1} parent=47 // pred_fallthru
          _
      $region48: #{tpu_custom_call.1} parent=5 // pred_fallthru
        _
      %p716 = scmp.le.s32.totalorder 2, %s21
      // Predicated region
      $region69: #{tpu_custom_call.1} parent=5 // pred_check
        %p717 = pneg %p716
      $region70: #{tpu_custom_call.1} parent=5 // pred_check_branch
        %719 = sbr.rel (%p717) target = $region72
      $region71: #{tpu_custom_call.1} parent=5 // pred_region
        %s720 = ssub.s32 %s21, 2
        // Predicated region
        $region73: #{tpu_custom_call.1} parent=71 // pred_check
          %p721 = pneg %p202
        $region74: #{tpu_custom_call.1} parent=71 // pred_check_branch
          %723 = sbr.rel (%p721) target = $region76
        $region75: #{tpu_custom_call.1} parent=71 // pred_region
          %s724 = sand.u32 %s187, 1
          %s725 = scalar_lea.sflag [#allocation4], %s724
          %s726 = sand.u32 %s187, 1
          %s727 = smul.addr %s726, 8
          %s728 = scalar_lea.vmem [#allocation10], %s727
          %729 = dma.done %s725, 128
        $region76: #{tpu_custom_call.1} parent=71 // pred_fallthru
          _
      $region72: #{tpu_custom_call.1} parent=5 // pred_fallthru
        _
    $region6: #{tpu_custom_call.1} parent=1 // loop_footer
      %s25 = sadd.s32 1, %s21
    $region7: #{tpu_custom_call.1} parent=1 // loop_footer_branch
      %20 = sbr.rel target = $region3
    $region8: #{tpu_custom_call.1} parent=1 // loop_exit
      _
    %730 = vsyncpa [#allocation3], 1
    %s731 = scalar_lea.sflag [#allocation3], 1
    %732 = vsyncpa %s731, 1
    %733 = vsyncpa [#allocation6], 1
    %734 = vsyncpa [#allocation9], 1
    %735 = vsyncpa [#allocation4], 1
    %s736 = scalar_lea.sflag [#allocation4], 1
    %737 = vsyncpa %s736, 1

</llo_original>
